<compile_context>
chip_gen: v5e
topology: v5e:2x2
jax: 0.10.0
libtpu: 0.0.40
codegen_flags: <defaults>
</compile_context>

<pallas_src>
import functools
import math

import jax
import jax.numpy as jnp
import numpy as np
from jax import lax
from jax.experimental import pallas as pl
from jax.experimental.pallas import tpu as pltpu


# ----------------------------- Pallas kernel ------------------------------- #
def _invert_bottleneck_kernel(x_ref, w1_ref, b1_ref, w2_ref, b2_ref, w3_ref,
                              b3_ref, mask_ref, o_ref, taps_ref,
                              *, spatial_w, lanes, cmid_p, add_shortcut):
    """One grid step = a block of samples packed on the lane axis.

    x_ref   : (1, C1p, lanes)        bf16  input slab (samples side-by-side)
    w1_ref  : (Cmp, C1p)             bf16  folded 1x1 conv weight (resident)
    b1_ref  : (Cmp, 1)               f32   folded bias
    w2_ref  : (Cmp, 9*Cmp)           bf16  folded 3x3 conv, taps stacked on K
    b2_ref  : (Cmp, 1)               f32
    w3_ref  : (C2p, Cmp)             bf16  folded 1x1 conv weight
    b3_ref  : (C2p, 1)               f32
    mask_ref: (9, 1, lanes)          f32   0/1 validity mask per tap / column
    o_ref   : (1, C2p, lanes)        bf16
    taps_ref: (9*Cmp, lanes)         bf16  VMEM scratch, stacked-K tap buffer
    """
    xb = x_ref[0]                                        # (C1p, lanes) bf16

    # ---- cv1: 1x1 conv (+ folded BN) + ReLU == one GEMM over channels -----
    a1 = jnp.dot(w1_ref[...], xb, preferred_element_type=jnp.float32)
    y1 = jnp.maximum(a1 + b1_ref[...], 0.0)              # (Cmp, lanes) f32

    # ---- cv2: 3x3 conv as ONE stacked-K GEMM -------------------------------
    # Each tap = XLU lane-roll of y1; masks kill wrapped / cross-row /
    # cross-sample / padded-tail sources.  Stores into taps_ref are at
    # aligned sublane offsets (multiples of Cmp, itself a multiple of 16) and
    # full lane width -> no masked/unaligned VMEM traffic.
    tap_idx = 0
    for dh in (-1, 0, 1):
        for dw in (-1, 0, 1):
            s = dh * spatial_w + dw
            if s == 0:
                # Center tap: its mask only guards padded-tail columns whose
                # outputs are discarded by the wrapper -> skip the multiply.
                tap = y1
            else:
                tap = pltpu.roll(y1, shift=(-s) % lanes, axis=1) * mask_ref[tap_idx]
            taps_ref[tap_idx * cmid_p:(tap_idx + 1) * cmid_p, :] = (
                tap.astype(jnp.bfloat16))
            tap_idx += 1
    a2 = jnp.dot(w2_ref[...], taps_ref[...], preferred_element_type=jnp.float32)
    y2 = jnp.maximum(a2 + b2_ref[...], 0.0).astype(jnp.bfloat16)

    # ---- cv3: 1x1 conv (+ folded BN) + ReLU --------------------------------
    a3 = jnp.dot(w3_ref[...], y2, preferred_element_type=jnp.float32)
    y3 = jnp.maximum(a3 + b3_ref[...], 0.0)

    if add_shortcut:
        y3 = y3 + xb.astype(jnp.float32)                 # residual add
    o_ref[0] = y3.astype(o_ref.dtype)


# ------------------------------- Glue (JAX) -------------------------------- #
def _round_up(v, m):
    return (v + m - 1) // m * m


def _fold_bn(w, gamma, beta, mean, var, eps):
    """Fold inference-mode BatchNorm into a bias-free conv: w', b'."""
    scale = gamma / jnp.sqrt(var + eps)
    return w * scale[:, None, None, None], beta - mean * scale


def invert_bottleneck(x, w1, bn1, w2, bn2, w3, bn3, *, shortcut=True, eps=1e-5,
                      target_lanes=4096):
    """Fused InvertBottleneck forward.  x: (B, c1, H, W) NCHW, weights OIHW."""
    B, c1, H, W = x.shape
    c_mid = w1.shape[0]
    c2 = w3.shape[0]
    assert w2.shape == (c_mid, c_mid, 3, 3), "groups > 1 not supported"
    add = bool(shortcut) and (c1 == c2)

    N = H * W
    n_pad = _round_up(N, 128)                 # lane-dense spatial columns
    c1_p = _round_up(c1, 16)                  # bf16 native (16,128) tiles
    cmid_p = _round_up(c_mid, 16)
    c2_p = _round_up(c2, 16)

    # Pack several samples onto the lane axis per grid step (amortize per-step
    # overhead, widen the GEMMs).  Keep >= 2 grid steps when B allows it so the
    # "parallel" batch axis can shard across TensorCores / pipeline.
    bb = max(1, min(B, target_lanes // n_pad))
    if bb > 1 and (B + bb - 1) // bb < 2:
        bb = max(1, (B + 1) // 2)
    steps = (B + bb - 1) // bb
    b_pad = steps * bb
    lanes = bb * n_pad

    # Fold BN (running-stats / inference mode) into conv weight + bias.
    w1f, b1f = _fold_bn(w1, *bn1, eps)
    w2f, b2f = _fold_bn(w2, *bn2, eps)
    w3f, b3f = _fold_bn(w3, *bn3, eps)

    # Zero-pad channels; weights to bf16 for the MXU.  w2 taps are stacked on
    # the contraction axis: w2s[:, t*Cmp:(t+1)*Cmp] = w2[:, :, kh, kw].
    w1p = jnp.zeros((cmid_p, c1_p), jnp.float32).at[:c_mid, :c1].set(
        w1f[:, :, 0, 0]).astype(jnp.bfloat16)
    w3p = jnp.zeros((c2_p, cmid_p), jnp.float32).at[:c2, :c_mid].set(
        w3f[:, :, 0, 0]).astype(jnp.bfloat16)
    w2taps = w2f.transpose(2, 3, 0, 1).reshape(9, c_mid, c_mid)
    w2p9 = jnp.zeros((9, cmid_p, cmid_p), jnp.float32).at[
        :, :c_mid, :c_mid].set(w2taps)
    w2s = w2p9.transpose(1, 0, 2).reshape(cmid_p, 9 * cmid_p).astype(jnp.bfloat16)
    b1p = jnp.zeros((cmid_p, 1), jnp.float32).at[:c_mid, 0].set(b1f)
    b2p = jnp.zeros((cmid_p, 1), jnp.float32).at[:c_mid, 0].set(b2f)
    b3p = jnp.zeros((c2_p, 1), jnp.float32).at[:c2, 0].set(b3f)

    # x -> (steps, c1_p, bb*n_pad), bf16 transport (cast BEFORE the pack pass).
    xf = x.reshape(B, c1, N).astype(jnp.bfloat16)
    xf = jnp.pad(xf, ((0, b_pad - B), (0, c1_p - c1), (0, n_pad - N)))
    xf = xf.reshape(steps, bb, c1_p, n_pad).transpose(0, 2, 1, 3)
    xf = xf.reshape(steps, c1_p, lanes)

    # Per-tap 0/1 validity masks (host precomputed, small, resident in VMEM).
    cols = np.arange(n_pad)
    hh, ww = cols // W, cols % W
    masks = np.zeros((9, 1, n_pad), np.float32)
    t = 0
    for dh in (-1, 0, 1):
        for dw in (-1, 0, 1):
            masks[t, 0] = ((cols < N) & (hh + dh >= 0) & (hh + dh < H) &
                           (ww + dw >= 0) & (ww + dw < W)).astype(np.float32)
            t += 1
    masks = jnp.asarray(np.tile(masks, (1, 1, bb)), jnp.float32)

    # Rough resident-VMEM estimate -> raise the scoped-VMEM limit to match the
    # wider blocks (defaults: 16 MiB v5e, 32 MiB v6e/v7x), capped for v7x.
    est = (2 * (c1_p + c2_p) * lanes * 2          # double-buffered in/out slabs
           + 2 * 9 * lanes * 4                    # masks (double-buffered)
           + 9 * cmid_p * lanes * 2               # stacked-K tap scratch
           + 6 * cmid_p * lanes * 4               # f32 intermediates headroom
           + 2 * (cmid_p * c1_p + cmid_p * 9 * cmid_p + c2_p * cmid_p) * 2)
    vmem_limit = int(min(max(2 * est, 32 << 20), 64 << 20))

    kernel = functools.partial(
        _invert_bottleneck_kernel,
        spatial_w=W, lanes=lanes, cmid_p=cmid_p, add_shortcut=add)

    out = pl.pallas_call(
        kernel,
        out_shape=jax.ShapeDtypeStruct((steps, c2_p, lanes), jnp.bfloat16),
        grid=(steps,),
        in_specs=[
            pl.BlockSpec((1, c1_p, lanes), lambda i: (i, 0, 0)),      # x slab
            pl.BlockSpec((cmid_p, c1_p), lambda i: (0, 0)),           # w1 (resident)
            pl.BlockSpec((cmid_p, 1), lambda i: (0, 0)),              # b1
            pl.BlockSpec((cmid_p, 9 * cmid_p), lambda i: (0, 0)),     # w2 stacked-K
            pl.BlockSpec((cmid_p, 1), lambda i: (0, 0)),              # b2
            pl.BlockSpec((c2_p, cmid_p), lambda i: (0, 0)),           # w3
            pl.BlockSpec((c2_p, 1), lambda i: (0, 0)),                # b3
            pl.BlockSpec((9, 1, lanes), lambda i: (0, 0, 0)),         # tap masks
        ],
        out_specs=pl.BlockSpec((1, c2_p, lanes), lambda i: (i, 0, 0)),
        scratch_shapes=[pltpu.VMEM((9 * cmid_p, lanes), jnp.bfloat16)],
        compiler_params=pltpu.CompilerParams(
            dimension_semantics=("parallel",),
            vmem_limit_bytes=vmem_limit),
    )(xf, w1p, b1p, w2s, b2p, w3p, b3p, masks)

    out = out.reshape(steps, c2_p, bb, n_pad).transpose(0, 2, 1, 3)
    out = out.reshape(b_pad, c2_p, n_pad)[:B, :c2, :N]
    return out.reshape(B, c2, H, W).astype(x.dtype)


# ------------------------------ Reference ---------------------------------- #
def _reference(x, w1, bn1, w2, bn2, w3, bn3, shortcut=True, eps=1e-5):
    def conv_bn_relu(t, w, bn, pad):
        y = lax.conv_general_dilated(
            t, w, window_strides=(1, 1),
            padding=[(pad, pad), (pad, pad)],
            dimension_numbers=("NCHW", "OIHW", "NCHW"))
        gamma, beta, mean, var = bn
        scale = gamma / jnp.sqrt(var + eps)
        y = y * scale[None, :, None, None] + \
            (beta - mean * scale)[None, :, None, None]
        return jnp.maximum(y, 0.0)

    t = conv_bn_relu(x, w1, bn1, 0)
    t = conv_bn_relu(t, w2, bn2, 1)
    t = conv_bn_relu(t, w3, bn3, 0)
    add = shortcut and x.shape[1] == w3.shape[0]
    return x + t if add else t


# --------------------------------- Main ------------------------------------ #
if __name__ == "__main__":
    B, c1, c2, H, W = 2, 4, 4, 16, 16
    e = 2
    c_mid = int(c2 * e)                       # hidden width of the bottleneck

    key = jax.random.PRNGKey(0)
    ks = jax.random.split(key, 7)

    x = jax.random.normal(ks[0], (B, c1, H, W), jnp.float32)

    def conv_w(k, cout, cin, ksz):            # kaiming_uniform_(a=sqrt(5)) bounds
        fan_in = cin * ksz * ksz
        bound = math.sqrt(6.0 / ((1.0 + 5.0) * fan_in))
        return jax.random.uniform(k, (cout, cin, ksz, ksz), jnp.float32,
                                  -bound, bound)

    def bn_params(k, c):                      # nontrivial eval-mode BN stats
        k1, k2, k3, k4 = jax.random.split(k, 4)
        gamma = jax.random.uniform(k1, (c,), jnp.float32, 0.8, 1.2)
        beta = 0.1 * jax.random.normal(k2, (c,), jnp.float32)
        mean = 0.1 * jax.random.normal(k3, (c,), jnp.float32)
        var = jax.random.uniform(k4, (c,), jnp.float32, 0.8, 1.2)
        return gamma, beta, mean, var

    w1 = conv_w(ks[1], c_mid, c1, 1); bn1 = bn_params(ks[2], c_mid)
    w2 = conv_w(ks[3], c_mid, c_mid, 3); bn2 = bn_params(ks[4], c_mid)
    w3 = conv_w(ks[5], c2, c_mid, 1); bn3 = bn_params(ks[6], c2)

    out = invert_bottleneck(x, w1, bn1, w2, bn2, w3, bn3, shortcut=True)
    out = jax.block_until_ready(out)

    ref = _reference(x, w1, bn1, w2, bn2, w3, bn3, shortcut=True)
    np.testing.assert_allclose(np.asarray(out), np.asarray(ref),
                               atol=5e-2, rtol=5e-2)

    print("KERNEL_OK")
</pallas_src>

<mosaic_0001>
module attributes {stable_mosaic.version = 11 : i64} {
  func.func @_invert_bottleneck_kernel(%arg0: i32, %arg1: memref<1x16x256xbf16, #tpu.memory_space<vmem>>, %arg2: memref<16x16xbf16, #tpu.memory_space<vmem>>, %arg3: memref<16x1xf32, #tpu.memory_space<vmem>>, %arg4: memref<16x144xbf16, #tpu.memory_space<vmem>>, %arg5: memref<16x1xf32, #tpu.memory_space<vmem>>, %arg6: memref<16x16xbf16, #tpu.memory_space<vmem>>, %arg7: memref<16x1xf32, #tpu.memory_space<vmem>>, %arg8: memref<9x1x256xf32, #tpu.memory_space<vmem>>, %arg9: memref<1x16x256xbf16, #tpu.memory_space<vmem>>, %arg10: memref<144x256xbf16, #tpu.memory_space<vmem>>) attributes {dimension_semantics = [#tpu.dimension_semantics<parallel>], iteration_bounds = array<i64: 2>, scalar_prefetch = 0 : i64, scratch_operands = 1 : i64, tpu.core_type = #tpu.core_type<tc>, window_params = [{transform_indices = @transform_0, window_bounds = array<i64: 1, 16, 256>}, {pipeline_mode = #tpu.pipeline_mode<synchronous>, transform_indices = @transform_1, window_bounds = array<i64: 16, 16>}, {pipeline_mode = #tpu.pipeline_mode<synchronous>, transform_indices = @transform_2, window_bounds = array<i64: 16, 1>}, {pipeline_mode = #tpu.pipeline_mode<synchronous>, transform_indices = @transform_3, window_bounds = array<i64: 16, 144>}, {pipeline_mode = #tpu.pipeline_mode<synchronous>, transform_indices = @transform_4, window_bounds = array<i64: 16, 1>}, {pipeline_mode = #tpu.pipeline_mode<synchronous>, transform_indices = @transform_5, window_bounds = array<i64: 16, 16>}, {pipeline_mode = #tpu.pipeline_mode<synchronous>, transform_indices = @transform_6, window_bounds = array<i64: 16, 1>}, {pipeline_mode = #tpu.pipeline_mode<synchronous>, transform_indices = @transform_7, window_bounds = array<i64: 9, 1, 256>}, {transform_indices = @transform_8, window_bounds = array<i64: 1, 16, 256>}]} {
    %c0 = arith.constant 0 : index
    %c0_0 = arith.constant 0 : index
    %c0_1 = arith.constant 0 : index
    %0 = vector.load %arg1[%c0, %c0_0, %c0_1] : memref<1x16x256xbf16, #tpu.memory_space<vmem>>, vector<1x16x256xbf16>
    %1 = vector.shape_cast %0 : vector<1x16x256xbf16> to vector<16x256xbf16>
    %c0_2 = arith.constant 0 : index
    %c0_3 = arith.constant 0 : index
    %2 = vector.load %arg2[%c0_2, %c0_3] : memref<16x16xbf16, #tpu.memory_space<vmem>>, vector<16x16xbf16>
    %cst = arith.constant dense<0.000000e+00> : vector<16x256xf32>
    %3 = tpu.matmul %2, %1, %cst {dimension_numbers = #tpu.dot_dimension_numbers<[1], [0], [0], [1], [0, 0, 1, 1], [], []>} : vector<16x16xbf16>, vector<16x256xbf16>, vector<16x256xf32> -> vector<16x256xf32>
    %c0_4 = arith.constant 0 : index
    %c0_5 = arith.constant 0 : index
    %4 = vector.load %arg3[%c0_4, %c0_5] : memref<16x1xf32, #tpu.memory_space<vmem>>, vector<16x1xf32>
    %5 = vector.broadcast %4 : vector<16x1xf32> to vector<16x256xf32>
    %6 = arith.addf %3, %5 : vector<16x256xf32>
    %cst_6 = arith.constant 0.000000e+00 : f32
    %7 = vector.broadcast %cst_6 : f32 to vector<16x256xf32>
    %8 = arith.maximumf %6, %7 : vector<16x256xf32>
    %c17_i32 = arith.constant 17 : i32
    %9 = tpu.dynamic_rotate %8 by %c17_i32 dim 1 : vector<16x256xf32>, i32 -> vector<16x256xf32>
    %c0_7 = arith.constant 0 : index
    %c0_8 = arith.constant 0 : index
    %c0_9 = arith.constant 0 : index
    %10 = vector.load %arg8[%c0_7, %c0_8, %c0_9] : memref<9x1x256xf32, #tpu.memory_space<vmem>>, vector<1x1x256xf32>
    %11 = vector.shape_cast %10 : vector<1x1x256xf32> to vector<1x256xf32>
    %12 = vector.broadcast %11 : vector<1x256xf32> to vector<16x256xf32>
    %13 = arith.mulf %9, %12 : vector<16x256xf32>
    %14 = arith.truncf %13 : vector<16x256xf32> to vector<16x256xbf16>
    %c0_10 = arith.constant 0 : index
    %c0_11 = arith.constant 0 : index
    %15 = vector.load %arg10[%c0_10, %c0_11] : memref<144x256xbf16, #tpu.memory_space<vmem>>, vector<16x256xbf16>
    tpu.vector_store %arg10[%c0_10, %c0_11], %14 {strides = array<i32>} : memref<144x256xbf16, #tpu.memory_space<vmem>>, vector<16x256xbf16>,
    %c16_i32 = arith.constant 16 : i32
    %16 = tpu.dynamic_rotate %8 by %c16_i32 dim 1 : vector<16x256xf32>, i32 -> vector<16x256xf32>
    %c1 = arith.constant 1 : index
    %c0_12 = arith.constant 0 : index
    %c0_13 = arith.constant 0 : index
    %17 = vector.load %arg8[%c1, %c0_12, %c0_13] : memref<9x1x256xf32, #tpu.memory_space<vmem>>, vector<1x1x256xf32>
    %18 = vector.shape_cast %17 : vector<1x1x256xf32> to vector<1x256xf32>
    %19 = vector.broadcast %18 : vector<1x256xf32> to vector<16x256xf32>
    %20 = arith.mulf %16, %19 : vector<16x256xf32>
    %21 = arith.truncf %20 : vector<16x256xf32> to vector<16x256xbf16>
    %c16 = arith.constant 16 : index
    %c0_14 = arith.constant 0 : index
    %22 = vector.load %arg10[%c16, %c0_14] : memref<144x256xbf16, #tpu.memory_space<vmem>>, vector<16x256xbf16>
    tpu.vector_store %arg10[%c16, %c0_14], %21 {strides = array<i32>} : memref<144x256xbf16, #tpu.memory_space<vmem>>, vector<16x256xbf16>,
    %c15_i32 = arith.constant 15 : i32
    %23 = tpu.dynamic_rotate %8 by %c15_i32 dim 1 : vector<16x256xf32>, i32 -> vector<16x256xf32>
    %c2 = arith.constant 2 : index
    %c0_15 = arith.constant 0 : index
    %c0_16 = arith.constant 0 : index
    %24 = vector.load %arg8[%c2, %c0_15, %c0_16] : memref<9x1x256xf32, #tpu.memory_space<vmem>>, vector<1x1x256xf32>
    %25 = vector.shape_cast %24 : vector<1x1x256xf32> to vector<1x256xf32>
    %26 = vector.broadcast %25 : vector<1x256xf32> to vector<16x256xf32>
    %27 = arith.mulf %23, %26 : vector<16x256xf32>
    %28 = arith.truncf %27 : vector<16x256xf32> to vector<16x256xbf16>
    %c32 = arith.constant 32 : index
    %c0_17 = arith.constant 0 : index
    %29 = vector.load %arg10[%c32, %c0_17] : memref<144x256xbf16, #tpu.memory_space<vmem>>, vector<16x256xbf16>
    tpu.vector_store %arg10[%c32, %c0_17], %28 {strides = array<i32>} : memref<144x256xbf16, #tpu.memory_space<vmem>>, vector<16x256xbf16>,
    %c1_i32 = arith.constant 1 : i32
    %30 = tpu.dynamic_rotate %8 by %c1_i32 dim 1 : vector<16x256xf32>, i32 -> vector<16x256xf32>
    %c3 = arith.constant 3 : index
    %c0_18 = arith.constant 0 : index
    %c0_19 = arith.constant 0 : index
    %31 = vector.load %arg8[%c3, %c0_18, %c0_19] : memref<9x1x256xf32, #tpu.memory_space<vmem>>, vector<1x1x256xf32>
    %32 = vector.shape_cast %31 : vector<1x1x256xf32> to vector<1x256xf32>
    %33 = vector.broadcast %32 : vector<1x256xf32> to vector<16x256xf32>
    %34 = arith.mulf %30, %33 : vector<16x256xf32>
    %35 = arith.truncf %34 : vector<16x256xf32> to vector<16x256xbf16>
    %c48 = arith.constant 48 : index
    %c0_20 = arith.constant 0 : index
    %36 = vector.load %arg10[%c48, %c0_20] : memref<144x256xbf16, #tpu.memory_space<vmem>>, vector<16x256xbf16>
    tpu.vector_store %arg10[%c48, %c0_20], %35 {strides = array<i32>} : memref<144x256xbf16, #tpu.memory_space<vmem>>, vector<16x256xbf16>,
    %37 = arith.truncf %8 : vector<16x256xf32> to vector<16x256xbf16>
    %c64 = arith.constant 64 : index
    %c0_21 = arith.constant 0 : index
    %38 = vector.load %arg10[%c64, %c0_21] : memref<144x256xbf16, #tpu.memory_space<vmem>>, vector<16x256xbf16>
    tpu.vector_store %arg10[%c64, %c0_21], %37 {strides = array<i32>} : memref<144x256xbf16, #tpu.memory_space<vmem>>, vector<16x256xbf16>,
    %c255_i32 = arith.constant 255 : i32
    %39 = tpu.dynamic_rotate %8 by %c255_i32 dim 1 : vector<16x256xf32>, i32 -> vector<16x256xf32>
    %c5 = arith.constant 5 : index
    %c0_22 = arith.constant 0 : index
    %c0_23 = arith.constant 0 : index
    %40 = vector.load %arg8[%c5, %c0_22, %c0_23] : memref<9x1x256xf32, #tpu.memory_space<vmem>>, vector<1x1x256xf32>
    %41 = vector.shape_cast %40 : vector<1x1x256xf32> to vector<1x256xf32>
    %42 = vector.broadcast %41 : vector<1x256xf32> to vector<16x256xf32>
    %43 = arith.mulf %39, %42 : vector<16x256xf32>
    %44 = arith.truncf %43 : vector<16x256xf32> to vector<16x256xbf16>
    %c80 = arith.constant 80 : index
    %c0_24 = arith.constant 0 : index
    %45 = vector.load %arg10[%c80, %c0_24] : memref<144x256xbf16, #tpu.memory_space<vmem>>, vector<16x256xbf16>
    tpu.vector_store %arg10[%c80, %c0_24], %44 {strides = array<i32>} : memref<144x256xbf16, #tpu.memory_space<vmem>>, vector<16x256xbf16>,
    %c241_i32 = arith.constant 241 : i32
    %46 = tpu.dynamic_rotate %8 by %c241_i32 dim 1 : vector<16x256xf32>, i32 -> vector<16x256xf32>
    %c6 = arith.constant 6 : index
    %c0_25 = arith.constant 0 : index
    %c0_26 = arith.constant 0 : index
    %47 = vector.load %arg8[%c6, %c0_25, %c0_26] : memref<9x1x256xf32, #tpu.memory_space<vmem>>, vector<1x1x256xf32>
    %48 = vector.shape_cast %47 : vector<1x1x256xf32> to vector<1x256xf32>
    %49 = vector.broadcast %48 : vector<1x256xf32> to vector<16x256xf32>
    %50 = arith.mulf %46, %49 : vector<16x256xf32>
    %51 = arith.truncf %50 : vector<16x256xf32> to vector<16x256xbf16>
    %c96 = arith.constant 96 : index
    %c0_27 = arith.constant 0 : index
    %52 = vector.load %arg10[%c96, %c0_27] : memref<144x256xbf16, #tpu.memory_space<vmem>>, vector<16x256xbf16>
    tpu.vector_store %arg10[%c96, %c0_27], %51 {strides = array<i32>} : memref<144x256xbf16, #tpu.memory_space<vmem>>, vector<16x256xbf16>,
    %c240_i32 = arith.constant 240 : i32
    %53 = tpu.dynamic_rotate %8 by %c240_i32 dim 1 : vector<16x256xf32>, i32 -> vector<16x256xf32>
    %c7 = arith.constant 7 : index
    %c0_28 = arith.constant 0 : index
    %c0_29 = arith.constant 0 : index
    %54 = vector.load %arg8[%c7, %c0_28, %c0_29] : memref<9x1x256xf32, #tpu.memory_space<vmem>>, vector<1x1x256xf32>
    %55 = vector.shape_cast %54 : vector<1x1x256xf32> to vector<1x256xf32>
    %56 = vector.broadcast %55 : vector<1x256xf32> to vector<16x256xf32>
    %57 = arith.mulf %53, %56 : vector<16x256xf32>
    %58 = arith.truncf %57 : vector<16x256xf32> to vector<16x256xbf16>
    %c112 = arith.constant 112 : index
    %c0_30 = arith.constant 0 : index
    %59 = vector.load %arg10[%c112, %c0_30] : memref<144x256xbf16, #tpu.memory_space<vmem>>, vector<16x256xbf16>
    tpu.vector_store %arg10[%c112, %c0_30], %58 {strides = array<i32>} : memref<144x256xbf16, #tpu.memory_space<vmem>>, vector<16x256xbf16>,
    %c239_i32 = arith.constant 239 : i32
    %60 = tpu.dynamic_rotate %8 by %c239_i32 dim 1 : vector<16x256xf32>, i32 -> vector<16x256xf32>
    %c8 = arith.constant 8 : index
    %c0_31 = arith.constant 0 : index
    %c0_32 = arith.constant 0 : index
    %61 = vector.load %arg8[%c8, %c0_31, %c0_32] : memref<9x1x256xf32, #tpu.memory_space<vmem>>, vector<1x1x256xf32>
    %62 = vector.shape_cast %61 : vector<1x1x256xf32> to vector<1x256xf32>
    %63 = vector.broadcast %62 : vector<1x256xf32> to vector<16x256xf32>
    %64 = arith.mulf %60, %63 : vector<16x256xf32>
    %65 = arith.truncf %64 : vector<16x256xf32> to vector<16x256xbf16>
    %c128 = arith.constant 128 : index
    %c0_33 = arith.constant 0 : index
    %66 = vector.load %arg10[%c128, %c0_33] : memref<144x256xbf16, #tpu.memory_space<vmem>>, vector<16x256xbf16>
    tpu.vector_store %arg10[%c128, %c0_33], %65 {strides = array<i32>} : memref<144x256xbf16, #tpu.memory_space<vmem>>, vector<16x256xbf16>,
    %c0_34 = arith.constant 0 : index
    %c0_35 = arith.constant 0 : index
    %67 = vector.load %arg4[%c0_34, %c0_35] : memref<16x144xbf16, #tpu.memory_space<vmem>>, vector<16x144xbf16>
    %c0_36 = arith.constant 0 : index
    %c0_37 = arith.constant 0 : index
    %68 = vector.load %arg10[%c0_36, %c0_37] : memref<144x256xbf16, #tpu.memory_space<vmem>>, vector<144x256xbf16>
    %cst_38 = arith.constant dense<0.000000e+00> : vector<16x256xf32>
    %69 = tpu.matmul %67, %68, %cst_38 {dimension_numbers = #tpu.dot_dimension_numbers<[1], [0], [0], [1], [0, 0, 1, 1], [], []>} : vector<16x144xbf16>, vector<144x256xbf16>, vector<16x256xf32> -> vector<16x256xf32>
    %c0_39 = arith.constant 0 : index
    %c0_40 = arith.constant 0 : index
    %70 = vector.load %arg5[%c0_39, %c0_40] : memref<16x1xf32, #tpu.memory_space<vmem>>, vector<16x1xf32>
    %71 = vector.broadcast %70 : vector<16x1xf32> to vector<16x256xf32>
    %72 = arith.addf %69, %71 : vector<16x256xf32>
    %cst_41 = arith.constant 0.000000e+00 : f32
    %73 = vector.broadcast %cst_41 : f32 to vector<16x256xf32>
    %74 = arith.maximumf %72, %73 : vector<16x256xf32>
    %75 = arith.truncf %74 : vector<16x256xf32> to vector<16x256xbf16>
    %c0_42 = arith.constant 0 : index
    %c0_43 = arith.constant 0 : index
    %76 = vector.load %arg6[%c0_42, %c0_43] : memref<16x16xbf16, #tpu.memory_space<vmem>>, vector<16x16xbf16>
    %cst_44 = arith.constant dense<0.000000e+00> : vector<16x256xf32>
    %77 = tpu.matmul %76, %75, %cst_44 {dimension_numbers = #tpu.dot_dimension_numbers<[1], [0], [0], [1], [0, 0, 1, 1], [], []>} : vector<16x16xbf16>, vector<16x256xbf16>, vector<16x256xf32> -> vector<16x256xf32>
    %c0_45 = arith.constant 0 : index
    %c0_46 = arith.constant 0 : index
    %78 = vector.load %arg7[%c0_45, %c0_46] : memref<16x1xf32, #tpu.memory_space<vmem>>, vector<16x1xf32>
    %79 = vector.broadcast %78 : vector<16x1xf32> to vector<16x256xf32>
    %80 = arith.addf %77, %79 : vector<16x256xf32>
    %cst_47 = arith.constant 0.000000e+00 : f32
    %81 = vector.broadcast %cst_47 : f32 to vector<16x256xf32>
    %82 = arith.maximumf %80, %81 : vector<16x256xf32>
    %83 = arith.extf %1 : vector<16x256xbf16> to vector<16x256xf32>
    %84 = arith.addf %82, %83 : vector<16x256xf32>
    %85 = arith.truncf %84 : vector<16x256xf32> to vector<16x256xbf16>
    %c0_48 = arith.constant 0 : index
    %c0_49 = arith.constant 0 : index
    %c0_50 = arith.constant 0 : index
    %86 = vector.load %arg9[%c0_48, %c0_49, %c0_50] : memref<1x16x256xbf16, #tpu.memory_space<vmem>>, vector<1x16x256xbf16>
    %87 = vector.shape_cast %86 : vector<1x16x256xbf16> to vector<16x256xbf16>
    %88 = vector.shape_cast %85 : vector<16x256xbf16> to vector<1x16x256xbf16>
    tpu.vector_store %arg9[%c0_48, %c0_49, %c0_50], %88 {strides = array<i32>} : memref<1x16x256xbf16, #tpu.memory_space<vmem>>, vector<1x16x256xbf16>,
    return
  }
  func.func @transform_0(%arg0: i32) -> (i32, i32, i32) {
    %c0_i32 = arith.constant 0 : i32
    %c0_i32_0 = arith.constant 0 : i32
    %c0_i32_1 = arith.constant 0 : i32
    return %arg0, %c0_i32, %c0_i32_0 : i32, i32, i32
  }
  func.func @transform_1(%arg0: i32) -> (i32, i32) {
    %c0_i32 = arith.constant 0 : i32
    %c0_i32_0 = arith.constant 0 : i32
    %c0_i32_1 = arith.constant 0 : i32
    return %c0_i32, %c0_i32_0 : i32, i32
  }
  func.func @transform_2(%arg0: i32) -> (i32, i32) {
    %c0_i32 = arith.constant 0 : i32
    %c0_i32_0 = arith.constant 0 : i32
    %c0_i32_1 = arith.constant 0 : i32
    return %c0_i32, %c0_i32_0 : i32, i32
  }
  func.func @transform_3(%arg0: i32) -> (i32, i32) {
    %c0_i32 = arith.constant 0 : i32
    %c0_i32_0 = arith.constant 0 : i32
    %c0_i32_1 = arith.constant 0 : i32
    return %c0_i32, %c0_i32_0 : i32, i32
  }
  func.func @transform_4(%arg0: i32) -> (i32, i32) {
    %c0_i32 = arith.constant 0 : i32
    %c0_i32_0 = arith.constant 0 : i32
    %c0_i32_1 = arith.constant 0 : i32
    return %c0_i32, %c0_i32_0 : i32, i32
  }
  func.func @transform_5(%arg0: i32) -> (i32, i32) {
    %c0_i32 = arith.constant 0 : i32
    %c0_i32_0 = arith.constant 0 : i32
    %c0_i32_1 = arith.constant 0 : i32
    return %c0_i32, %c0_i32_0 : i32, i32
  }
  func.func @transform_6(%arg0: i32) -> (i32, i32) {
    %c0_i32 = arith.constant 0 : i32
    %c0_i32_0 = arith.constant 0 : i32
    %c0_i32_1 = arith.constant 0 : i32
    return %c0_i32, %c0_i32_0 : i32, i32
  }
  func.func @transform_7(%arg0: i32) -> (i32, i32, i32) {
    %c0_i32 = arith.constant 0 : i32
    %c0_i32_0 = arith.constant 0 : i32
    %c0_i32_1 = arith.constant 0 : i32
    %c0_i32_2 = arith.constant 0 : i32
    return %c0_i32, %c0_i32_0, %c0_i32_1 : i32, i32, i32
  }
  func.func @transform_8(%arg0: i32) -> (i32, i32, i32) {
    %c0_i32 = arith.constant 0 : i32
    %c0_i32_0 = arith.constant 0 : i32
    %c0_i32_1 = arith.constant 0 : i32
    return %arg0, %c0_i32, %c0_i32_0 : i32, i32, i32
  }
}

</mosaic_0001>

<llo_original>
// kernel: tpu_custom_call.1
$region0: #{tpu_custom_call.1}
  #allocation0 [shape = 'u32[]', space=smem, size = 0x4, offset = 0x4, fixed_abs, tag = 'smem constant byte address 0x4 - core index']
  #allocation1 [shape = 'u32[72,128]{1,0:T(1,128)}', space=vmem, size = 0x9000, scoped, tag = 'internal scratch']
  #allocation2 [shape = 'bf16[144,256]{1,0:T(8,128)(2,1)}', space=vmem, size = 0x12000, scoped, tag = 'scratch operand']
  %s0 = inlined_call_operand.vmem [shape: bf16[2,16,256], index: 0, kind: input, shape index: {}]
  %s1 = inlined_call_operand.hbm [shape: bf16[16,16], index: 1, kind: input, shape index: {}]
  %s2 = inlined_call_operand.vmem [shape: f32[16,1], index: 2, kind: input, shape index: {}]
  %s3 = inlined_call_operand.vmem [shape: bf16[16,144], index: 3, kind: input, shape index: {}]
  %s4 = inlined_call_operand.vmem [shape: f32[16,1], index: 4, kind: input, shape index: {}]
  %s5 = inlined_call_operand.hbm [shape: bf16[16,16], index: 5, kind: input, shape index: {}]
  %s6 = inlined_call_operand.vmem [shape: f32[16,1], index: 6, kind: input, shape index: {}]
  %s7 = inlined_call_operand.hbm [shape: f32[9,1,256], index: 7, kind: input, shape index: {}]
  %s8 = inlined_call_operand.hbm [shape: bf16[2,16,256], index: 8, kind: output, shape index: {}]
  %s9 = sld [smem:[#allocation0]]
  $region77: #{tpu_custom_call.1} parent=0
    _
  %s11 = ssub.s32 1, %s9
  %s12 = scalar_select 0, %s11, %s9
  $region1: #{tpu_custom_call.1} parent=0
    #allocation3 [shape = 'u8[4096]{0}', space=vmem, size = 0x1000, scoped, tag = 'input window, operand 1, single buffered']
    #allocation4 [shape = 's32[2]{0}', space=sflag, size = 0x8, scoped, tag = 'scoped memory for tpu_custom_call.1']
    #allocation5 [shape = 's32[2]{0}', space=sflag, size = 0x8, scoped, tag = 'scoped memory for tpu_custom_call.1']
    #allocation6 [shape = 'u8[4096]{0}', space=vmem, size = 0x1000, scoped, tag = 'input window, operand 5, single buffered']
    #allocation7 [shape = 's32[1]{0}', space=sflag, size = 0x4, scoped, tag = 'scoped memory for tpu_custom_call.1']
    #allocation8 [shape = 'u8[9216]{0}', space=vmem, size = 0x2400, scoped, tag = 'input window, operand 7, single buffered']
    #allocation9 [shape = 'u8[16384]{0}', space=vmem, size = 0x4000, scoped, tag = 'output window, operand 0']
    %13 = vsyncpa [#allocation4], 0
    %14 = vsyncpa [#allocation7], 0
    %15 = vsyncpa [#allocation5], 0
    %s16 = scalar_lea.sflag [#allocation5], 1
    %17 = vsyncpa %s16, 0
    loop: start=0, step=1, limit=4
    $region2: #{tpu_custom_call.1} parent=1 // loop_pre_header
      _
    $region3: #{tpu_custom_call.1} parent=1 // loop_header
      %s19 = sphi 0, %s23
      %p20 = scmp.ge.s32.totalorder %s19, 4
      %s29 = sphi 0, %s31
      %s32 = sphi 0, %s29
      %s33 = sphi 0, %s32
      %s49 = sphi 0, %s33
      %s53 = sphi 0, %s53
      %s55 = sphi 0, %s53
      %s56 = sphi 0, %s55
      %s70 = sphi 0, %s56
      %s74 = sphi 0, %s74
      %s76 = sphi 0, %s74
      %s77 = sphi 0, %s76
      %s91 = sphi 0, %s77
      %s95 = sphi 0, %s95
      %s97 = sphi 0, %s95
      %s98 = sphi 0, %s97
      %s112 = sphi 0, %s98
      %s116 = sphi 0, %s116
      %s118 = sphi 0, %s116
      %s119 = sphi 0, %s118
      %s133 = sphi 0, %s119
      %s137 = sphi 0, %s137
      %s139 = sphi 0, %s137
      %s140 = sphi 0, %s139
      %s154 = sphi 0, %s140
      %s158 = sphi 0, %s158
      %s160 = sphi 0, %s158
      %s161 = sphi 0, %s160
      %s175 = sphi 0, %s161
      %s179 = sphi 0, %s179
      %s181 = sphi 0, %s179
      %s182 = sphi 0, %s181
      %s196 = sphi 0, %s182
      %s202 = sphi 0, %s204
      %s205 = sphi 0, %s202
      %s206 = sphi 0, %s205
      %s222 = sphi 0, %s206
    $region4: #{tpu_custom_call.1} parent=1 // loop_header_branch
      %22 = sbr.rel (%p20) target = $region8
    $region5: #{tpu_custom_call.1} parent=1 // loop_body
      %s24 = ssub.s32 %s19, 1
      %s25 = ssub.s32 %s19, 2
      %s26 = sadd.s32 %s19, 1
      %s27 = ssub.s32 %s19, %s26
      %p28 = scmp.eq.s32.totalorder %s27, 0
      %s30 = sadd.s32 %s29, 1
      %s31 = scalar_select %p28, %s29, %s30
      %p34 = pneg %p28
      %p35 = scmp.eq.s32.totalorder %s19, 1
      %p36 = por %p34, %p35
      %p37 = scmp.ne.s32.totalorder %s29, %s32
      %p38 = scmp.eq.s32.totalorder %s19, 0
      %p39 = por %p37, %p38
      %p40 = scmp.ne.s32.totalorder %s29, %s32
      %p41 = scmp.eq.s32.totalorder %s24, 1
      %p42 = por %p40, %p41
      %p43 = scmp.ne.s32.totalorder %s32, %s33
      %p44 = scmp.eq.s32.totalorder %s24, 0
      %p45 = por %p43, %p44
      %p46 = scmp.ne.s32.totalorder %s32, %s33
      %p47 = scmp.eq.s32.totalorder %s25, 1
      %p48 = por %p46, %p47
      %p50 = scmp.ne.s32.totalorder %s33, %s49
      %p51 = scmp.eq.s32.totalorder %s25, 0
      %p52 = por %p50, %p51
      %s54 = sadd.s32 %s53, 1
      %p57 = scmp.eq.s32.totalorder %s19, 1
      %p58 = scmp.ne.s32.totalorder %s53, %s55
      %p59 = scmp.eq.s32.totalorder %s19, 0
      %p60 = por %p58, %p59
      %p61 = scmp.ne.s32.totalorder %s53, %s55
      %p62 = scmp.eq.s32.totalorder %s24, 1
      %p63 = por %p61, %p62
      %p64 = scmp.ne.s32.totalorder %s55, %s56
      %p65 = scmp.eq.s32.totalorder %s24, 0
      %p66 = por %p64, %p65
      %p67 = scmp.ne.s32.totalorder %s55, %s56
      %p68 = scmp.eq.s32.totalorder %s25, 1
      %p69 = por %p67, %p68
      %p71 = scmp.ne.s32.totalorder %s56, %s70
      %p72 = scmp.eq.s32.totalorder %s25, 0
      %p73 = por %p71, %p72
      %s75 = sadd.s32 %s74, 1
      %p78 = scmp.eq.s32.totalorder %s19, 1
      %p79 = scmp.ne.s32.totalorder %s74, %s76
      %p80 = scmp.eq.s32.totalorder %s19, 0
      %p81 = por %p79, %p80
      %p82 = scmp.ne.s32.totalorder %s74, %s76
      %p83 = scmp.eq.s32.totalorder %s24, 1
      %p84 = por %p82, %p83
      %p85 = scmp.ne.s32.totalorder %s76, %s77
      %p86 = scmp.eq.s32.totalorder %s24, 0
      %p87 = por %p85, %p86
      %p88 = scmp.ne.s32.totalorder %s76, %s77
      %p89 = scmp.eq.s32.totalorder %s25, 1
      %p90 = por %p88, %p89
      %p92 = scmp.ne.s32.totalorder %s77, %s91
      %p93 = scmp.eq.s32.totalorder %s25, 0
      %p94 = por %p92, %p93
      %s96 = sadd.s32 %s95, 1
      %p99 = scmp.eq.s32.totalorder %s19, 1
      %p100 = scmp.ne.s32.totalorder %s95, %s97
      %p101 = scmp.eq.s32.totalorder %s19, 0
      %p102 = por %p100, %p101
      %p103 = scmp.ne.s32.totalorder %s95, %s97
      %p104 = scmp.eq.s32.totalorder %s24, 1
      %p105 = por %p103, %p104
      %p106 = scmp.ne.s32.totalorder %s97, %s98
      %p107 = scmp.eq.s32.totalorder %s24, 0
      %p108 = por %p106, %p107
      %p109 = scmp.ne.s32.totalorder %s97, %s98
      %p110 = scmp.eq.s32.totalorder %s25, 1
      %p111 = por %p109, %p110
      %p113 = scmp.ne.s32.totalorder %s98, %s112
      %p114 = scmp.eq.s32.totalorder %s25, 0
      %p115 = por %p113, %p114
      %s117 = sadd.s32 %s116, 1
      %p120 = scmp.eq.s32.totalorder %s19, 1
      %p121 = scmp.ne.s32.totalorder %s116, %s118
      %p122 = scmp.eq.s32.totalorder %s19, 0
      %p123 = por %p121, %p122
      %p124 = scmp.ne.s32.totalorder %s116, %s118
      %p125 = scmp.eq.s32.totalorder %s24, 1
      %p126 = por %p124, %p125
      %p127 = scmp.ne.s32.totalorder %s118, %s119
      %p128 = scmp.eq.s32.totalorder %s24, 0
      %p129 = por %p127, %p128
      %p130 = scmp.ne.s32.totalorder %s118, %s119
      %p131 = scmp.eq.s32.totalorder %s25, 1
      %p132 = por %p130, %p131
      %p134 = scmp.ne.s32.totalorder %s119, %s133
      %p135 = scmp.eq.s32.totalorder %s25, 0
      %p136 = por %p134, %p135
      %s138 = sadd.s32 %s137, 1
      %p141 = scmp.eq.s32.totalorder %s19, 1
      %p142 = scmp.ne.s32.totalorder %s137, %s139
      %p143 = scmp.eq.s32.totalorder %s19, 0
      %p144 = por %p142, %p143
      %p145 = scmp.ne.s32.totalorder %s137, %s139
      %p146 = scmp.eq.s32.totalorder %s24, 1
      %p147 = por %p145, %p146
      %p148 = scmp.ne.s32.totalorder %s139, %s140
      %p149 = scmp.eq.s32.totalorder %s24, 0
      %p150 = por %p148, %p149
      %p151 = scmp.ne.s32.totalorder %s139, %s140
      %p152 = scmp.eq.s32.totalorder %s25, 1
      %p153 = por %p151, %p152
      %p155 = scmp.ne.s32.totalorder %s140, %s154
      %p156 = scmp.eq.s32.totalorder %s25, 0
      %p157 = por %p155, %p156
      %s159 = sadd.s32 %s158, 1
      %p162 = scmp.eq.s32.totalorder %s19, 1
      %p163 = scmp.ne.s32.totalorder %s158, %s160
      %p164 = scmp.eq.s32.totalorder %s19, 0
      %p165 = por %p163, %p164
      %p166 = scmp.ne.s32.totalorder %s158, %s160
      %p167 = scmp.eq.s32.totalorder %s24, 1
      %p168 = por %p166, %p167
      %p169 = scmp.ne.s32.totalorder %s160, %s161
      %p170 = scmp.eq.s32.totalorder %s24, 0
      %p171 = por %p169, %p170
      %p172 = scmp.ne.s32.totalorder %s160, %s161
      %p173 = scmp.eq.s32.totalorder %s25, 1
      %p174 = por %p172, %p173
      %p176 = scmp.ne.s32.totalorder %s161, %s175
      %p177 = scmp.eq.s32.totalorder %s25, 0
      %p178 = por %p176, %p177
      %s180 = sadd.s32 %s179, 1
      %p183 = scmp.eq.s32.totalorder %s19, 1
      %p184 = scmp.ne.s32.totalorder %s179, %s181
      %p185 = scmp.eq.s32.totalorder %s19, 0
      %p186 = por %p184, %p185
      %p187 = scmp.ne.s32.totalorder %s179, %s181
      %p188 = scmp.eq.s32.totalorder %s24, 1
      %p189 = por %p187, %p188
      %p190 = scmp.ne.s32.totalorder %s181, %s182
      %p191 = scmp.eq.s32.totalorder %s24, 0
      %p192 = por %p190, %p191
      %p193 = scmp.ne.s32.totalorder %s181, %s182
      %p194 = scmp.eq.s32.totalorder %s25, 1
      %p195 = por %p193, %p194
      %p197 = scmp.ne.s32.totalorder %s182, %s196
      %p198 = scmp.eq.s32.totalorder %s25, 0
      %p199 = por %p197, %p198
      %s200 = ssub.s32 %s19, %s26
      %p201 = scmp.eq.s32.totalorder %s200, 0
      %s203 = sadd.s32 %s202, 1
      %s204 = scalar_select %p201, %s202, %s203
      %p207 = pneg %p201
      %p208 = scmp.eq.s32.totalorder %s19, 1
      %p209 = por %p207, %p208
      %p210 = scmp.ne.s32.totalorder %s202, %s205
      %p211 = scmp.eq.s32.totalorder %s19, 0
      %p212 = por %p210, %p211
      %p213 = scmp.ne.s32.totalorder %s202, %s205
      %p214 = scmp.eq.s32.totalorder %s24, 1
      %p215 = por %p213, %p214
      %p216 = scmp.ne.s32.totalorder %s205, %s206
      %p217 = scmp.eq.s32.totalorder %s24, 0
      %p218 = por %p216, %p217
      %p219 = scmp.ne.s32.totalorder %s205, %s206
      %p220 = scmp.eq.s32.totalorder %s25, 1
      %p221 = por %p219, %p220
      %p223 = scmp.ne.s32.totalorder %s206, %s222
      %p224 = scmp.eq.s32.totalorder %s25, 0
      %p225 = por %p223, %p224
      %p226 = scmp.le.s32.totalorder 1, %s19
      %p227 = scmp.lt.s32.totalorder %s19, 3
      %p228 = pnand %p226, %p227
      %p229 = pneg %p228
      // Predicated region
      $region9: #{tpu_custom_call.1} parent=5 // pred_check
        _
      $region10: #{tpu_custom_call.1} parent=5 // pred_check_branch
        %231 = sbr.rel (%p228) target = $region12
      $region11: #{tpu_custom_call.1} parent=5 // pred_region
        %s232 = ssub.s32 %s19, 1
        // Predicated region
        $region13: #{tpu_custom_call.1} parent=11 // pred_check
          %p233 = pneg %p66
        $region14: #{tpu_custom_call.1} parent=11 // pred_check_branch
          %235 = sbr.rel (%p233) target = $region16
        $region15: #{tpu_custom_call.1} parent=11 // pred_region
          %237 = vsyncadd [#allocation4], 0
          %s238 = sshll.u32 %s1, 4
          %s239 = int_to_ptr.hbm [resolvable:$true] %s238
          %s240 = sshll.u32 [#allocation3], 4
          %s241 = int_to_ptr.vmem [resolvable:$true] %s240
          %246 = dma.hbm_to_vmem [thread:$0]  %s239, 128, %s241, [#allocation4], 64, 64, 4
        $region16: #{tpu_custom_call.1} parent=11 // pred_fallthru
          _
        // Predicated region
        $region17: #{tpu_custom_call.1} parent=11 // pred_check
          %p247 = pneg %p87
        $region18: #{tpu_custom_call.1} parent=11 // pred_check_branch
          %249 = sbr.rel (%p247) target = $region20
        $region19: #{tpu_custom_call.1} parent=11 // pred_region
          _
        $region20: #{tpu_custom_call.1} parent=11 // pred_fallthru
          _
        // Predicated region
        $region21: #{tpu_custom_call.1} parent=11 // pred_check
          %p250 = pneg %p108
        $region22: #{tpu_custom_call.1} parent=11 // pred_check_branch
          %252 = sbr.rel (%p250) target = $region24
        $region23: #{tpu_custom_call.1} parent=11 // pred_region
          _
        $region24: #{tpu_custom_call.1} parent=11 // pred_fallthru
          _
        // Predicated region
        $region25: #{tpu_custom_call.1} parent=11 // pred_check
          %p253 = pneg %p129
        $region26: #{tpu_custom_call.1} parent=11 // pred_check_branch
          %255 = sbr.rel (%p253) target = $region28
        $region27: #{tpu_custom_call.1} parent=11 // pred_region
          _
        $region28: #{tpu_custom_call.1} parent=11 // pred_fallthru
          _
        // Predicated region
        $region29: #{tpu_custom_call.1} parent=11 // pred_check
          %p256 = pneg %p150
        $region30: #{tpu_custom_call.1} parent=11 // pred_check_branch
          %258 = sbr.rel (%p256) target = $region32
        $region31: #{tpu_custom_call.1} parent=11 // pred_region
          %260 = vsyncadd [#allocation7], 0
          %s261 = sshll.u32 %s5, 4
          %s262 = int_to_ptr.hbm [resolvable:$true] %s261
          %s263 = sshll.u32 [#allocation6], 4
          %s264 = int_to_ptr.vmem [resolvable:$true] %s263
          %269 = dma.hbm_to_vmem [thread:$0]  %s262, 128, %s264, [#allocation7], 64, 64, 4
        $region32: #{tpu_custom_call.1} parent=11 // pred_fallthru
          _
        // Predicated region
        $region33: #{tpu_custom_call.1} parent=11 // pred_check
          %p270 = pneg %p171
        $region34: #{tpu_custom_call.1} parent=11 // pred_check_branch
          %272 = sbr.rel (%p270) target = $region36
        $region35: #{tpu_custom_call.1} parent=11 // pred_region
          _
        $region36: #{tpu_custom_call.1} parent=11 // pred_fallthru
          _
        // Predicated region
        $region37: #{tpu_custom_call.1} parent=11 // pred_check
          %p273 = pneg %p192
        $region38: #{tpu_custom_call.1} parent=11 // pred_check_branch
          %275 = sbr.rel (%p273) target = $region40
        $region39: #{tpu_custom_call.1} parent=11 // pred_region
          %277 = vsyncadd [#allocation7], 0
          %s278 = sshll.u32 %s7, 4
          %s279 = int_to_ptr.hbm [resolvable:$true] %s278
          %s280 = sshll.u32 [#allocation8], 4
          %s281 = int_to_ptr.vmem [resolvable:$true] %s280
          %286 = dma.hbm_to_vmem [thread:$0]  %s279, 288, %s281, [#allocation7], 32, 32, 2
        $region40: #{tpu_custom_call.1} parent=11 // pred_fallthru
          _
      $region12: #{tpu_custom_call.1} parent=5 // pred_fallthru
        _
      %p287 = scmp.lt.s32.totalorder %s19, 2
      // Predicated region
      $region41: #{tpu_custom_call.1} parent=5 // pred_check
        %p288 = pneg %p287
      $region42: #{tpu_custom_call.1} parent=5 // pred_check_branch
        %290 = sbr.rel (%p288) target = $region44
      $region43: #{tpu_custom_call.1} parent=5 // pred_region
        // Predicated region
        $region45: #{tpu_custom_call.1} parent=43 // pred_check
          %p291 = pneg %p39
        $region46: #{tpu_custom_call.1} parent=43 // pred_check_branch
          %293 = sbr.rel (%p291) target = $region48
        $region47: #{tpu_custom_call.1} parent=43 // pred_region
          %p294 = scmp.lt.s32.totalorder %s19, 1
          %s295 = scalar_select %p294, %s19, 1
          %s296 = smul.addr %s295, 4
          %s297 = smul.addr %s296, 4
          %s298 = scalar_lea.vmem %s0, %s297
        $region48: #{tpu_custom_call.1} parent=43 // pred_fallthru
          _
      $region44: #{tpu_custom_call.1} parent=5 // pred_fallthru
        _
      %p299 = scmp.le.s32.totalorder 1, %s19
      %p300 = scmp.lt.s32.totalorder %s19, 3
      %p301 = pnand %p299, %p300
      %p302 = pneg %p301
      // Predicated region
      $region49: #{tpu_custom_call.1} parent=5 // pred_check
        _
      $region50: #{tpu_custom_call.1} parent=5 // pred_check_branch
        %304 = sbr.rel (%p301) target = $region52
      $region51: #{tpu_custom_call.1} parent=5 // pred_region
        %s305 = ssub.s32 %s19, 1
        // Predicated region
        $region53: #{tpu_custom_call.1} parent=51 // pred_check
          %p306 = pneg %p66
        $region54: #{tpu_custom_call.1} parent=51 // pred_check_branch
          %308 = sbr.rel (%p306) target = $region56
        $region55: #{tpu_custom_call.1} parent=51 // pred_region
          %310 = dma.done [#allocation4], 128
        $region56: #{tpu_custom_call.1} parent=51 // pred_fallthru
          _
        // Predicated region
        $region57: #{tpu_custom_call.1} parent=51 // pred_check
          %p311 = pneg %p150
        $region58: #{tpu_custom_call.1} parent=51 // pred_check_branch
          %313 = sbr.rel (%p311) target = $region60
        $region59: #{tpu_custom_call.1} parent=51 // pred_region
          %315 = dma.done [#allocation7], 128
        $region60: #{tpu_custom_call.1} parent=51 // pred_fallthru
          _
        // Predicated region
        $region61: #{tpu_custom_call.1} parent=51 // pred_check
          %p316 = pneg %p192
        $region62: #{tpu_custom_call.1} parent=51 // pred_check_branch
          %318 = sbr.rel (%p316) target = $region64
        $region63: #{tpu_custom_call.1} parent=51 // pred_region
          %320 = dma.done [#allocation7], 288
        $region64: #{tpu_custom_call.1} parent=51 // pred_fallthru
          _
        %p321 = scmp.lt.s32.totalorder %s24, 1
        %s322 = scalar_select %p321, %s24, 1
        %s323 = smul.addr %s322, 4
        %s324 = smul.addr %s323, 4
        %s325 = scalar_lea.vmem %s0, %s324
        %p326 = pneg %p45
        %p327 = pneg %p42
        %p328 = pneg %p66
        %p329 = pneg %p63
        %p330 = pneg %p87
        %p331 = pneg %p84
        %p332 = pneg %p108
        %p333 = pneg %p105
        %p334 = pneg %p129
        %p335 = pneg %p126
        %p336 = pneg %p150
        %p337 = pneg %p147
        %p338 = pneg %p171
        %p339 = pneg %p168
        %p340 = pneg %p192
        %p341 = pneg %p189
        %p342 = pneg %p218
        %p343 = pneg %p215
        %s344 = sand.u32 %s205, 1
        %s345 = scalar_lea.sflag [#allocation5], %s344
        %s346 = sand.u32 %s205, 1
        %s347 = smul.addr %s346, 16
        %s348 = scalar_lea.vmem [#allocation9], %s347
        %p349 = scmp.lt.s32.totalorder %s24, 1
        %s350 = scalar_select %p349, %s24, 1
        %s351 = smul.addr %s350, 4
        %s352 = smul.addr %s351, 4
        %s353 = scalar_lea.vmem %s0, %s352
        %v355 = vld [vmem:[%s353] sm:$0xff]
        %v356 = vld [vmem:[%s353 + $0x8] sm:$0xff]
        %v357 = vld [vmem:[#allocation3] sm:$0xf]
        %v358 = vld [vmem:[#allocation3 + $0x4] sm:$0xf]
        %v359 = vld [vmem:[%s2] sm:$0xff]
        %v360 = vld [vmem:[%s2 + $0x8] sm:$0xff]
        %362 = vset.pattern.permute.xlu0 0
        %363 = vperm.xlu0 %362, %v359
        %v364 = vpop.permute.xlu0 %363
        %367 = vset.pattern.permute.xlu0 0
        %368 = vperm.xlu0 %367, %v360
        %v369 = vpop.permute.xlu0 %368
        %v373 = vunpack.c.l.b16 %v357
        %v374 = vunpack.c.l.b16 %v358
        %v375 = vpack.c.b16 %v374, %v373
        %v378 = vunpack.c.l.b16 %v355
        %v379 = vunpack.c.h.b16 %v355
        %v380 = vunpack.c.l.b16 %v356
        %v381 = vunpack.c.h.b16 %v356
        %v382 = vpack.c.b16 %v380, %v378
        %v383 = vpack.c.b16 %v381, %v379
        %vm386 = vcmask 130048
        %v388 = vsel %vm386, %v375, 0
        %390 = vmatpush.bf16.msra.mxu0 0
        %391 = vmatpush.bf16.msra.mxu0 0
        %392 = vmatpush.bf16.msra.mxu0 0
        %393 = vmatpush.bf16.msra.mxu0 0
        %394 = vmatpush.bf16.msra.mxu0 0
        %395 = vmatpush.bf16.msra.mxu0 0
        %396 = vmatpush.bf16.msra.mxu0 0
        %397 = vmatpush.bf16.msra.mxu0 %v382
        %398 = vmatmul.bf16.gmra.mxu0 %v388
        %v399 = vpop.f32.mrf.mxu0
        %v400 = vadd.f32 %v364, %v399
        %v401 = vpop.f32.mrf.mxu0
        %v402 = vadd.f32 %v369, %v401
        %403 = vdwg.mxu0
        %404 = vmatpush.bf16.msra.mxu0 0
        %405 = vmatpush.bf16.msra.mxu0 0
        %406 = vmatpush.bf16.msra.mxu0 0
        %407 = vmatpush.bf16.msra.mxu0 0
        %408 = vmatpush.bf16.msra.mxu0 0
        %409 = vmatpush.bf16.msra.mxu0 0
        %410 = vmatpush.bf16.msra.mxu0 0
        %411 = vmatpush.bf16.msra.mxu0 %v383
        %412 = vmatmul.bf16.gmra.mxu0 %v388
        %v413 = vpop.f32.mrf.mxu0
        %v414 = vadd.f32 %v364, %v413
        %v415 = vpop.f32.mrf.mxu0
        %v416 = vadd.f32 %v369, %v415
        %417 = vdwg.mxu0
        %v418 = vmax.f32 %v400, 0.0
        %v419 = vmax.f32 %v414, 0.0
        %v420 = vmax.f32 %v402, 0.0
        %v421 = vmax.f32 %v416, 0.0
        %422 = vrot.lane.b32.xlu0 %v418, 17
        %v423 = vpop.permute.xlu0 %422
        %424 = vrot.lane.b32.xlu0 %v420, 17
        %v425 = vpop.permute.xlu0 %424
        %426 = vrot.lane.b32.xlu0 %v419, 17
        %v427 = vpop.permute.xlu0 %426
        %428 = vrot.lane.b32.xlu0 %v421, 17
        %v429 = vpop.permute.xlu0 %428
        %v430 = vlaneseq
        %v431 = vand.u32 %v430, 127
        %vm432 = vcmp.lt.s32.totalorder %v431, 17
        %v433 = vsel %vm432, %v423, %v427
        %v434 = vsel %vm432, %v425, %v429
        %v435 = vsel %vm432, %v427, %v423
        %v436 = vsel %vm432, %v429, %v425
        %v437 = vld [vmem:[#allocation8] sm:$0x3]
        %v439 = vperm.slane %v437, 0
        %v440 = vperm.slane %v437, 1
        %v443 = vmul.f32 %v435, %v439
        %v444 = vmul.f32 %v433, %v440
        %v445 = vmul.f32 %v436, %v439
        %v446 = vmul.f32 %v434, %v440
        %v447 = vpack.c.bf16 %v444, %v443
        %v448 = vpack.c.bf16 %v446, %v445
        %449 = vst [vmem:[#allocation2] sm:$0xff] %v447
        %450 = vst [vmem:[#allocation2 + $0x8] sm:$0xff] %v448
        %451 = vrot.lane.b32.xlu0 %v418, 16
        %v452 = vpop.permute.xlu0 %451
        %453 = vrot.lane.b32.xlu0 %v420, 16
        %v454 = vpop.permute.xlu0 %453
        %455 = vrot.lane.b32.xlu0 %v419, 16
        %v456 = vpop.permute.xlu0 %455
        %457 = vrot.lane.b32.xlu0 %v421, 16
        %v458 = vpop.permute.xlu0 %457
        %vm459 = vcmp.lt.s32.totalorder %v431, 16
        %v460 = vsel %vm459, %v452, %v456
        %v461 = vsel %vm459, %v454, %v458
        %v462 = vsel %vm459, %v456, %v452
        %v463 = vsel %vm459, %v458, %v454
        %s464 = scalar_lea.vmem [#allocation8], 2
        %v465 = vld [vmem:[%s464] sm:$0x3]
        %v467 = vperm.slane %v465, 0
        %v468 = vperm.slane %v465, 1
        %v471 = vmul.f32 %v462, %v467
        %v472 = vmul.f32 %v460, %v468
        %v473 = vmul.f32 %v463, %v467
        %v474 = vmul.f32 %v461, %v468
        %v475 = vpack.c.bf16 %v472, %v471
        %v476 = vpack.c.bf16 %v474, %v473
        %477 = vst [vmem:[#allocation2 + $0x10] sm:$0xff] %v475
        %478 = vst [vmem:[#allocation2 + $0x18] sm:$0xff] %v476
        %479 = vrot.lane.b32.xlu0 %v418, 15
        %v480 = vpop.permute.xlu0 %479
        %481 = vrot.lane.b32.xlu0 %v420, 15
        %v482 = vpop.permute.xlu0 %481
        %483 = vrot.lane.b32.xlu0 %v419, 15
        %v484 = vpop.permute.xlu0 %483
        %485 = vrot.lane.b32.xlu0 %v421, 15
        %v486 = vpop.permute.xlu0 %485
        %vm487 = vcmp.lt.s32.totalorder %v431, 15
        %v488 = vsel %vm487, %v480, %v484
        %v489 = vsel %vm487, %v482, %v486
        %v490 = vsel %vm487, %v484, %v480
        %v491 = vsel %vm487, %v486, %v482
        %s492 = scalar_lea.vmem [#allocation8], 4
        %v493 = vld [vmem:[%s492] sm:$0x3]
        %v495 = vperm.slane %v493, 0
        %v496 = vperm.slane %v493, 1
        %v499 = vmul.f32 %v490, %v495
        %v500 = vmul.f32 %v488, %v496
        %v501 = vmul.f32 %v491, %v495
        %v502 = vmul.f32 %v489, %v496
        %v503 = vpack.c.bf16 %v500, %v499
        %v504 = vpack.c.bf16 %v502, %v501
        %505 = vst [vmem:[#allocation2 + $0x20] sm:$0xff] %v503
        %506 = vst [vmem:[#allocation2 + $0x28] sm:$0xff] %v504
        %507 = vrot.lane.b32.xlu0 %v418, 1
        %v508 = vpop.permute.xlu0 %507
        %509 = vrot.lane.b32.xlu0 %v420, 1
        %v510 = vpop.permute.xlu0 %509
        %511 = vrot.lane.b32.xlu0 %v419, 1
        %v512 = vpop.permute.xlu0 %511
        %513 = vrot.lane.b32.xlu0 %v421, 1
        %v514 = vpop.permute.xlu0 %513
        %vm515 = vcmp.lt.s32.totalorder %v431, 1
        %v516 = vsel %vm515, %v508, %v512
        %v517 = vsel %vm515, %v510, %v514
        %v518 = vsel %vm515, %v512, %v508
        %v519 = vsel %vm515, %v514, %v510
        %s520 = scalar_lea.vmem [#allocation8], 6
        %v521 = vld [vmem:[%s520] sm:$0x3]
        %v523 = vperm.slane %v521, 0
        %v524 = vperm.slane %v521, 1
        %v527 = vmul.f32 %v518, %v523
        %v528 = vmul.f32 %v516, %v524
        %v529 = vmul.f32 %v519, %v523
        %v530 = vmul.f32 %v517, %v524
        %v531 = vpack.c.bf16 %v528, %v527
        %v532 = vpack.c.bf16 %v530, %v529
        %533 = vst [vmem:[#allocation2 + $0x30] sm:$0xff] %v531
        %534 = vst [vmem:[#allocation2 + $0x38] sm:$0xff] %v532
        %v535 = vpack.c.bf16 %v419, %v418
        %v536 = vpack.c.bf16 %v421, %v420
        %537 = vst [vmem:[#allocation2 + $0x40] sm:$0xff] %v535
        %538 = vst [vmem:[#allocation2 + $0x48] sm:$0xff] %v536
        %539 = vrot.lane.b32.xlu0 %v418, 127
        %v540 = vpop.permute.xlu0 %539
        %541 = vrot.lane.b32.xlu0 %v420, 127
        %v542 = vpop.permute.xlu0 %541
        %543 = vrot.lane.b32.xlu0 %v419, 127
        %v544 = vpop.permute.xlu0 %543
        %545 = vrot.lane.b32.xlu0 %v421, 127
        %v546 = vpop.permute.xlu0 %545
        %vm547 = vcmp.lt.s32.totalorder %v431, 127
        %v548 = vsel %vm547, %v540, %v544
        %v549 = vsel %vm547, %v542, %v546
        %v550 = vsel %vm547, %v544, %v540
        %v551 = vsel %vm547, %v546, %v542
        %s552 = scalar_lea.vmem [#allocation8], 10
        %v553 = vld [vmem:[%s552] sm:$0x3]
        %v555 = vperm.slane %v553, 0
        %v556 = vperm.slane %v553, 1
        %v559 = vmul.f32 %v548, %v555
        %v560 = vmul.f32 %v550, %v556
        %v561 = vmul.f32 %v549, %v555
        %v562 = vmul.f32 %v551, %v556
        %v563 = vpack.c.bf16 %v560, %v559
        %v564 = vpack.c.bf16 %v562, %v561
        %565 = vst [vmem:[#allocation2 + $0x50] sm:$0xff] %v563
        %566 = vst [vmem:[#allocation2 + $0x58] sm:$0xff] %v564
        %567 = vrot.lane.b32.xlu0 %v418, 113
        %v568 = vpop.permute.xlu0 %567
        %569 = vrot.lane.b32.xlu0 %v420, 113
        %v570 = vpop.permute.xlu0 %569
        %571 = vrot.lane.b32.xlu0 %v419, 113
        %v572 = vpop.permute.xlu0 %571
        %573 = vrot.lane.b32.xlu0 %v421, 113
        %v574 = vpop.permute.xlu0 %573
        %vm575 = vcmp.lt.s32.totalorder %v431, 113
        %v576 = vsel %vm575, %v568, %v572
        %v577 = vsel %vm575, %v570, %v574
        %v578 = vsel %vm575, %v572, %v568
        %v579 = vsel %vm575, %v574, %v570
        %s580 = scalar_lea.vmem [#allocation8], 12
        %v581 = vld [vmem:[%s580] sm:$0x3]
        %v583 = vperm.slane %v581, 0
        %v584 = vperm.slane %v581, 1
        %v587 = vmul.f32 %v576, %v583
        %v588 = vmul.f32 %v578, %v584
        %v589 = vmul.f32 %v577, %v583
        %v590 = vmul.f32 %v579, %v584
        %v591 = vpack.c.bf16 %v588, %v587
        %v592 = vpack.c.bf16 %v590, %v589
        %593 = vst [vmem:[#allocation2 + $0x60] sm:$0xff] %v591
        %594 = vst [vmem:[#allocation2 + $0x68] sm:$0xff] %v592
        %595 = vrot.lane.b32.xlu0 %v418, 112
        %v596 = vpop.permute.xlu0 %595
        %597 = vrot.lane.b32.xlu0 %v420, 112
        %v598 = vpop.permute.xlu0 %597
        %599 = vrot.lane.b32.xlu0 %v419, 112
        %v600 = vpop.permute.xlu0 %599
        %601 = vrot.lane.b32.xlu0 %v421, 112
        %v602 = vpop.permute.xlu0 %601
        %vm603 = vcmp.lt.s32.totalorder %v431, 112
        %v604 = vsel %vm603, %v596, %v600
        %v605 = vsel %vm603, %v598, %v602
        %v606 = vsel %vm603, %v600, %v596
        %v607 = vsel %vm603, %v602, %v598
        %s608 = scalar_lea.vmem [#allocation8], 14
        %v609 = vld [vmem:[%s608] sm:$0x3]
        %v611 = vperm.slane %v609, 0
        %v612 = vperm.slane %v609, 1
        %v615 = vmul.f32 %v604, %v611
        %v616 = vmul.f32 %v606, %v612
        %v617 = vmul.f32 %v605, %v611
        %v618 = vmul.f32 %v607, %v612
        %v619 = vpack.c.bf16 %v616, %v615
        %v620 = vpack.c.bf16 %v618, %v617
        %621 = vst [vmem:[#allocation2 + $0x70] sm:$0xff] %v619
        %622 = vst [vmem:[#allocation2 + $0x78] sm:$0xff] %v620
        %623 = vrot.lane.b32.xlu0 %v418, 111
        %v624 = vpop.permute.xlu0 %623
        %625 = vrot.lane.b32.xlu0 %v420, 111
        %v626 = vpop.permute.xlu0 %625
        %627 = vrot.lane.b32.xlu0 %v419, 111
        %v628 = vpop.permute.xlu0 %627
        %629 = vrot.lane.b32.xlu0 %v421, 111
        %v630 = vpop.permute.xlu0 %629
        %vm631 = vcmp.lt.s32.totalorder %v431, 111
        %v632 = vsel %vm631, %v624, %v628
        %v633 = vsel %vm631, %v626, %v630
        %v634 = vsel %vm631, %v628, %v624
        %v635 = vsel %vm631, %v630, %v626
        %s636 = scalar_lea.vmem [#allocation8], 16
        %v637 = vld [vmem:[%s636] sm:$0x3]
        %v639 = vperm.slane %v637, 0
        %v640 = vperm.slane %v637, 1
        %v643 = vmul.f32 %v632, %v639
        %v644 = vmul.f32 %v634, %v640
        %v645 = vmul.f32 %v633, %v639
        %v646 = vmul.f32 %v635, %v640
        %v647 = vpack.c.bf16 %v644, %v643
        %v648 = vpack.c.bf16 %v646, %v645
        %649 = vst [vmem:[#allocation2 + $0x80] sm:$0xff] %v647
        %650 = vst [vmem:[#allocation2 + $0x88] sm:$0xff] %v648
        %v651 = vld [vmem:[%s3] sm:$0xff]
        %v652 = vld [vmem:[%s3 + $0x8] sm:$0xff]
        %v653 = vld [vmem:[#allocation2] sm:$0xff]
        %v654 = vld [vmem:[#allocation2 + $0x8] sm:$0xff]
        %v655 = vld [vmem:[#allocation2 + $0x10] sm:$0xff]
        %v656 = vld [vmem:[#allocation2 + $0x18] sm:$0xff]
        %v657 = vld [vmem:[#allocation2 + $0x20] sm:$0xff]
        %v658 = vld [vmem:[#allocation2 + $0x28] sm:$0xff]
        %v659 = vld [vmem:[#allocation2 + $0x30] sm:$0xff]
        %v660 = vld [vmem:[#allocation2 + $0x38] sm:$0xff]
        %v661 = vld [vmem:[#allocation2 + $0x40] sm:$0xff]
        %v662 = vld [vmem:[#allocation2 + $0x48] sm:$0xff]
        %v663 = vld [vmem:[#allocation2 + $0x50] sm:$0xff]
        %v664 = vld [vmem:[#allocation2 + $0x58] sm:$0xff]
        %v665 = vld [vmem:[#allocation2 + $0x60] sm:$0xff]
        %v666 = vld [vmem:[#allocation2 + $0x68] sm:$0xff]
        %v667 = vld [vmem:[#allocation2 + $0x70] sm:$0xff]
        %v668 = vld [vmem:[#allocation2 + $0x78] sm:$0xff]
        %v669 = vld [vmem:[#allocation2 + $0x80] sm:$0xff]
        %v670 = vld [vmem:[#allocation2 + $0x88] sm:$0xff]
        %v671 = vld [vmem:[%s4] sm:$0xff]
        %v672 = vld [vmem:[%s4 + $0x8] sm:$0xff]
        %674 = vset.pattern.permute.xlu0 0
        %675 = vperm.xlu0 %674, %v671
        %v676 = vpop.permute.xlu0 %675
        %679 = vset.pattern.permute.xlu0 0
        %680 = vperm.xlu0 %679, %v672
        %v681 = vpop.permute.xlu0 %680
        %v685 = vunpack.c.l.b16 %v651
        %v686 = vunpack.c.h.b16 %v651
        %v687 = vunpack.c.l.b16 %v652
        %v688 = vunpack.c.h.b16 %v652
        %v689 = vpack.c.b16 %v687, %v685
        %v690 = vpack.c.b16 %v688, %v686
        %v710 = vunpack.c.l.b16 %v653
        %v711 = vunpack.c.h.b16 %v653
        %v712 = vunpack.c.l.b16 %v654
        %v713 = vunpack.c.h.b16 %v654
        %v714 = vunpack.c.l.b16 %v655
        %v715 = vunpack.c.h.b16 %v655
        %v716 = vunpack.c.l.b16 %v656
        %v717 = vunpack.c.h.b16 %v656
        %v718 = vunpack.c.l.b16 %v657
        %v719 = vunpack.c.h.b16 %v657
        %v720 = vunpack.c.l.b16 %v658
        %v721 = vunpack.c.h.b16 %v658
        %v722 = vunpack.c.l.b16 %v659
        %v723 = vunpack.c.h.b16 %v659
        %v724 = vunpack.c.l.b16 %v660
        %v725 = vunpack.c.h.b16 %v660
        %v726 = vunpack.c.l.b16 %v661
        %v727 = vunpack.c.h.b16 %v661
        %v728 = vunpack.c.l.b16 %v662
        %v729 = vunpack.c.h.b16 %v662
        %v730 = vunpack.c.l.b16 %v663
        %v731 = vunpack.c.h.b16 %v663
        %v732 = vunpack.c.l.b16 %v664
        %v733 = vunpack.c.h.b16 %v664
        %v734 = vunpack.c.l.b16 %v665
        %v735 = vunpack.c.h.b16 %v665
        %v736 = vunpack.c.l.b16 %v666
        %v737 = vunpack.c.h.b16 %v666
        %v738 = vunpack.c.l.b16 %v667
        %v739 = vunpack.c.h.b16 %v667
        %v740 = vunpack.c.l.b16 %v668
        %v741 = vunpack.c.h.b16 %v668
        %v742 = vunpack.c.l.b16 %v669
        %v743 = vunpack.c.h.b16 %v669
        %v744 = vunpack.c.l.b16 %v670
        %v745 = vunpack.c.h.b16 %v670
        %v746 = vpack.c.b16 %v712, %v710
        %v747 = vpack.c.b16 %v713, %v711
        %v748 = vpack.c.b16 %v716, %v714
        %v749 = vpack.c.b16 %v717, %v715
        %v750 = vpack.c.b16 %v720, %v718
        %v751 = vpack.c.b16 %v721, %v719
        %v752 = vpack.c.b16 %v724, %v722
        %v753 = vpack.c.b16 %v725, %v723
        %v754 = vpack.c.b16 %v728, %v726
        %v755 = vpack.c.b16 %v729, %v727
        %v756 = vpack.c.b16 %v732, %v730
        %v757 = vpack.c.b16 %v733, %v731
        %v758 = vpack.c.b16 %v736, %v734
        %v759 = vpack.c.b16 %v737, %v735
        %v760 = vpack.c.b16 %v740, %v738
        %v761 = vpack.c.b16 %v741, %v739
        %v762 = vpack.c.b16 %v744, %v742
        %v763 = vpack.c.b16 %v745, %v743
        %v783 = vsel %vm386, %v690, 0
        %785 = vmatpush.bf16.msra.mxu0 %v760
        %786 = vmatpush.bf16.msra.mxu0 %v758
        %787 = vmatpush.bf16.msra.mxu0 %v756
        %788 = vmatpush.bf16.msra.mxu0 %v754
        %789 = vmatpush.bf16.msra.mxu0 %v752
        %790 = vmatpush.bf16.msra.mxu0 %v750
        %791 = vmatpush.bf16.msra.mxu0 %v748
        %792 = vmatpush.bf16.msra.mxu0 %v746
        %793 = vmatmul.bf16.gmra.mxu0 %v689
        %v794 = vpop.f32.mrf.mxu0
        %v795 = vadd.f32 %v676, %v794
        %v796 = vpop.f32.mrf.mxu0
        %v797 = vadd.f32 %v681, %v796
        %798 = vdwg.mxu0
        %799 = vmatpush.bf16.msra.mxu0 0
        %800 = vmatpush.bf16.msra.mxu0 0
        %801 = vmatpush.bf16.msra.mxu0 0
        %802 = vmatpush.bf16.msra.mxu0 0
        %803 = vmatpush.bf16.msra.mxu0 0
        %804 = vmatpush.bf16.msra.mxu0 0
        %805 = vmatpush.bf16.msra.mxu0 0
        %806 = vmatpush.bf16.msra.mxu0 %v762
        %807 = vmatmul.bf16.gmra.mxu0 %v783
        %v808 = vpop.f32.mrf.mxu0
        %v809 = vadd.f32 %v795, %v808
        %v810 = vpop.f32.mrf.mxu0
        %v811 = vadd.f32 %v797, %v810
        %812 = vdwg.mxu0
        %813 = vmatpush.bf16.msra.mxu0 %v761
        %814 = vmatpush.bf16.msra.mxu0 %v759
        %815 = vmatpush.bf16.msra.mxu0 %v757
        %816 = vmatpush.bf16.msra.mxu0 %v755
        %817 = vmatpush.bf16.msra.mxu0 %v753
        %818 = vmatpush.bf16.msra.mxu0 %v751
        %819 = vmatpush.bf16.msra.mxu0 %v749
        %820 = vmatpush.bf16.msra.mxu0 %v747
        %821 = vmatmul.bf16.gmra.mxu0 %v689
        %v822 = vpop.f32.mrf.mxu0
        %v823 = vadd.f32 %v676, %v822
        %v824 = vpop.f32.mrf.mxu0
        %v825 = vadd.f32 %v681, %v824
        %826 = vdwg.mxu0
        %827 = vmatpush.bf16.msra.mxu0 0
        %828 = vmatpush.bf16.msra.mxu0 0
        %829 = vmatpush.bf16.msra.mxu0 0
        %830 = vmatpush.bf16.msra.mxu0 0
        %831 = vmatpush.bf16.msra.mxu0 0
        %832 = vmatpush.bf16.msra.mxu0 0
        %833 = vmatpush.bf16.msra.mxu0 0
        %834 = vmatpush.bf16.msra.mxu0 %v763
        %835 = vmatmul.bf16.gmra.mxu0 %v783
        %v836 = vpop.f32.mrf.mxu0
        %v837 = vadd.f32 %v823, %v836
        %v838 = vpop.f32.mrf.mxu0
        %v839 = vadd.f32 %v825, %v838
        %840 = vdwg.mxu0
        %v841 = vmax.f32 %v809, 0.0
        %v842 = vmax.f32 %v837, 0.0
        %v843 = vmax.f32 %v811, 0.0
        %v844 = vmax.f32 %v839, 0.0
        %v845 = vpack.c.bf16 %v843, %v841
        %v846 = vpack.c.bf16 %v844, %v842
        %v847 = vld [vmem:[#allocation6] sm:$0xf]
        %v848 = vld [vmem:[#allocation6 + $0x4] sm:$0xf]
        %v849 = vld [vmem:[%s6] sm:$0xff]
        %v850 = vld [vmem:[%s6 + $0x8] sm:$0xff]
        %852 = vset.pattern.permute.xlu0 0
        %853 = vperm.xlu0 %852, %v849
        %v854 = vpop.permute.xlu0 %853
        %857 = vset.pattern.permute.xlu0 0
        %858 = vperm.xlu0 %857, %v850
        %v859 = vpop.permute.xlu0 %858
        %v863 = vunpack.c.l.b16 %v847
        %v864 = vunpack.c.l.b16 %v848
        %v865 = vpack.c.b16 %v864, %v863
        %v867 = vsel %vm386, %v865, 0
        %869 = vmatpush.bf16.msra.mxu0 0
        %870 = vmatpush.bf16.msra.mxu0 0
        %871 = vmatpush.bf16.msra.mxu0 0
        %872 = vmatpush.bf16.msra.mxu0 0
        %873 = vmatpush.bf16.msra.mxu0 0
        %874 = vmatpush.bf16.msra.mxu0 0
        %875 = vmatpush.bf16.msra.mxu0 0
        %876 = vmatpush.bf16.msra.mxu0 %v845
        %877 = vmatmul.bf16.gmra.mxu0 %v867
        %v878 = vpop.f32.mrf.mxu0
        %v879 = vadd.f32 %v854, %v878
        %v880 = vpop.f32.mrf.mxu0
        %v881 = vadd.f32 %v859, %v880
        %882 = vdwg.mxu0
        %883 = vmatpush.bf16.msra.mxu0 0
        %884 = vmatpush.bf16.msra.mxu0 0
        %885 = vmatpush.bf16.msra.mxu0 0
        %886 = vmatpush.bf16.msra.mxu0 0
        %887 = vmatpush.bf16.msra.mxu0 0
        %888 = vmatpush.bf16.msra.mxu0 0
        %889 = vmatpush.bf16.msra.mxu0 0
        %890 = vmatpush.bf16.msra.mxu0 %v846
        %891 = vmatmul.bf16.gmra.mxu0 %v867
        %v892 = vpop.f32.mrf.mxu0
        %v893 = vadd.f32 %v854, %v892
        %v894 = vpop.f32.mrf.mxu0
        %v895 = vadd.f32 %v859, %v894
        %896 = vdwg.mxu0
        %v897 = vmax.f32 %v879, 0.0
        %v898 = vmax.f32 %v893, 0.0
        %v899 = vmax.f32 %v881, 0.0
        %v900 = vmax.f32 %v895, 0.0
        %v901 = vunpack.c.l.bf16 %v355
        %v902 = vunpack.c.h.bf16 %v355
        %v903 = vunpack.c.l.bf16 %v356
        %v904 = vunpack.c.h.bf16 %v356
        %v905 = vadd.f32 %v897, %v901
        %v906 = vadd.f32 %v898, %v902
        %v907 = vadd.f32 %v899, %v903
        %v908 = vadd.f32 %v900, %v904
        %v909 = vpack.c.bf16 %v906, %v905
        %v910 = vpack.c.bf16 %v908, %v907
        %911 = vst [vmem:[%s348] sm:$0xff] %v909
        %912 = vst [vmem:[%s348 + $0x8] sm:$0xff] %v910
        %s913 = sand.u32 %s205, 1
        %s914 = scalar_lea.sflag [#allocation5], %s913
        %s915 = sand.u32 %s205, 1
        %s916 = smul.addr %s915, 16
        %s917 = scalar_lea.vmem [#allocation9], %s916
        // Predicated region
        $region65: #{tpu_custom_call.1} parent=51 // pred_check
          %p918 = pneg %p215
        $region66: #{tpu_custom_call.1} parent=51 // pred_check_branch
          %920 = sbr.rel (%p918) target = $region68
        $region67: #{tpu_custom_call.1} parent=51 // pred_region
          %922 = vsyncadd %s914, 0
          %s923 = smul.addr %s24, 4
          %s924 = smul.addr %s923, 4
          %s925 = scalar_lea.hbm %s8, %s924
          %s926 = sshll.u32 %s917, 4
          %s927 = int_to_ptr.vmem [resolvable:$true] %s926
          %s928 = sshll.u32 %s925, 4
          %s929 = int_to_ptr.hbm [resolvable:$true] %s928
          %934 = dma.vmem_to_hbm [thread:$0]  %s927, 256, %s929, %s914, 128, 128, 8
        $region68: #{tpu_custom_call.1} parent=51 // pred_fallthru
          _
      $region52: #{tpu_custom_call.1} parent=5 // pred_fallthru
        _
      %p935 = scmp.le.s32.totalorder 2, %s19
      // Predicated region
      $region69: #{tpu_custom_call.1} parent=5 // pred_check
        %p936 = pneg %p935
      $region70: #{tpu_custom_call.1} parent=5 // pred_check_branch
        %938 = sbr.rel (%p936) target = $region72
      $region71: #{tpu_custom_call.1} parent=5 // pred_region
        %s939 = ssub.s32 %s19, 2
        // Predicated region
        $region73: #{tpu_custom_call.1} parent=71 // pred_check
          %p940 = pneg %p221
        $region74: #{tpu_custom_call.1} parent=71 // pred_check_branch
          %942 = sbr.rel (%p940) target = $region76
        $region75: #{tpu_custom_call.1} parent=71 // pred_region
          %s943 = sand.u32 %s206, 1
          %s944 = scalar_lea.sflag [#allocation5], %s943
          %s945 = sand.u32 %s206, 1
          %s946 = smul.addr %s945, 16
          %s947 = scalar_lea.vmem [#allocation9], %s946
          %949 = dma.done %s944, 256
        $region76: #{tpu_custom_call.1} parent=71 // pred_fallthru
          _
      $region72: #{tpu_custom_call.1} parent=5 // pred_fallthru
        _
    $region6: #{tpu_custom_call.1} parent=1 // loop_footer
      %s23 = sadd.s32 1, %s19
    $region7: #{tpu_custom_call.1} parent=1 // loop_footer_branch
      %18 = sbr.rel target = $region3
    $region8: #{tpu_custom_call.1} parent=1 // loop_exit
      _
    %950 = vsyncpa [#allocation4], 1
    %s951 = scalar_lea.sflag [#allocation4], 1
    %952 = vsyncpa %s951, 1
    %953 = vsyncpa [#allocation7], 1
    %954 = vsyncpa [#allocation5], 1
    %s955 = scalar_lea.sflag [#allocation5], 1
    %956 = vsyncpa %s955, 1

</llo_original>
